<compile_context>
chip_gen: v7x
topology: tpu7x:2x2x1
jax: 0.10.0
libtpu: 0.0.40
codegen_flags: <defaults>
</compile_context>

<pallas_src>
import math
import jax
import jax.numpy as jnp
from jax.experimental import pallas as pl
from jax.experimental.pallas import tpu as pltpu


def _linreg_kernel(x_ref, w_ref, o_ref):
    # x_ref: [TM, F], w_ref: [1, F], o_ref: [TM, 1]
    # VPU elementwise multiply (weight broadcast over rows) + XLU lane reduce.
    o_ref[...] = jnp.sum(x_ref[...] * w_ref[...], axis=-1, keepdims=True)


def _round_up(n, m):
    return ((n + m - 1) // m) * m


def _vmem_limit_bytes():
    """Per-generation scoped-VMEM limit.

    v5e/v6e: 128 MiB physical (16/32 MiB scoped default); v7x: 64 MiB per TC.
    Use 3/4 of physical, capped at 64 MiB (more than enough for ~8 MiB tiles),
    with a v7x-safe fallback if the hardware query is unavailable.
    """
    try:
        cap = int(pltpu.get_tpu_info().vmem_capacity_bytes)
    except Exception:
        cap = 64 * 1024 * 1024  # conservative (v7x-sized) fallback
    return min(cap * 3 // 4, 64 * 1024 * 1024)


def linear_regression_forward(x, weight, *, target_tile_bytes=8 * 1024 * 1024):
    """Forward pass of LinearRegression (bias=False).

    Args:
      x:      [batch, num_feats] float32
      weight: [1, num_feats] float32  (PyTorch nn.Linear weight layout)
      target_tile_bytes: target lane-padded VMEM bytes of X per grid step.

    Returns:
      [batch, 1] float32  ==  x @ weight.T
    """
    batch, num_feats = x.shape
    itemsize = jnp.dtype(x.dtype).itemsize

    lane_f = _round_up(num_feats, 128)      # lane-padded feature width in VMEM
    x_row_bytes = lane_f * itemsize         # VMEM bytes per X row
    o_row_bytes = 128 * itemsize            # (TM, 1) out tile lane-pads to 128

    vmem_limit = _vmem_limit_bytes()
    # Double-buffered X tile + double-buffered out tile + double-buffered weight
    # (padded to 8 sublanes) must fit with ~2 MiB headroom for internal scratch.
    buf_budget = vmem_limit - 2 * 1024 * 1024
    tm_vmem = (buf_budget - 16 * x_row_bytes) // (2 * (x_row_bytes + o_row_bytes))
    tm_target = target_tile_bytes // x_row_bytes

    tm = min(tm_target, tm_vmem)
    # Keep >= 2 grid steps whenever the batch allows it (v7x megacore sharding).
    if batch > 8:
        tm = min(tm, _round_up(pl.cdiv(batch, 2), 8))
    tm = min(tm, _round_up(batch, 8))       # never bigger than the (padded) batch
    tm = max(8, (tm // 8) * 8)              # multiple of 8 (sublane tiling)

    grid = (pl.cdiv(batch, tm),)            # ragged last block handled by Pallas

    cost = pl.CostEstimate(
        flops=2 * batch * num_feats,
        transcendentals=0,
        bytes_accessed=(batch * num_feats + num_feats + batch) * itemsize,
    )

    return pl.pallas_call(
        _linreg_kernel,
        out_shape=jax.ShapeDtypeStruct((batch, 1), x.dtype),
        grid_spec=pltpu.PrefetchScalarGridSpec(
            num_scalar_prefetch=0,
            grid=grid,
            in_specs=[
                pl.BlockSpec((tm, num_feats), lambda i: (i, 0)),
                pl.BlockSpec((1, num_feats), lambda i: (0, 0)),
            ],
            out_specs=pl.BlockSpec((tm, 1), lambda i: (i, 0)),
        ),
        compiler_params=pltpu.CompilerParams(
            dimension_semantics=("parallel",),
            vmem_limit_bytes=vmem_limit,
        ),
        cost_estimate=cost,
    )(x, weight)


if __name__ == "__main__":
    key = jax.random.PRNGKey(0)
    kx, kw, kx2 = jax.random.split(key, 3)

    # --- Small primary check (matches the module's implied shapes) ---
    batch, num_feats = 8, 32
    x = jax.random.normal(kx, (batch, num_feats), dtype=jnp.float32)
    bound = 1.0 / math.sqrt(num_feats)  # PyTorch nn.Linear default init bound
    weight = jax.random.uniform(
        kw, (1, num_feats), minval=-bound, maxval=bound, dtype=jnp.float32
    )

    out = jax.block_until_ready(linear_regression_forward(x, weight))
    ref = x @ weight.T
    assert out.shape == (batch, 1)
    assert jnp.allclose(out, ref, atol=1e-5, rtol=1e-5)

    # --- Second check: multi-step grid + ragged last block (no padding path) ---
    batch2 = 300
    x2 = jax.random.normal(kx2, (batch2, num_feats), dtype=jnp.float32)
    out2 = jax.block_until_ready(
        linear_regression_forward(x2, weight, target_tile_bytes=64 * 1024)
    )
    ref2 = x2 @ weight.T
    assert out2.shape == (batch2, 1)
    assert jnp.allclose(out2, ref2, atol=1e-5, rtol=1e-5)

    # --- Third check: default tile sizing on the same ragged batch ---
    out3 = jax.block_until_ready(linear_regression_forward(x2, weight))
    assert out3.shape == (batch2, 1)
    assert jnp.allclose(out3, ref2, atol=1e-5, rtol=1e-5)

    print("KERNEL_OK")
</pallas_src>

<mosaic_0001>
module attributes {stable_mosaic.version = 11 : i64} {
  func.func @_linreg_kernel(%arg0: i32, %arg1: memref<8x32xf32, #tpu.memory_space<vmem>>, %arg2: memref<1x32xf32, #tpu.memory_space<vmem>>, %arg3: memref<8x1xf32, #tpu.memory_space<vmem>>) attributes {dimension_semantics = [#tpu.dimension_semantics<parallel>], iteration_bounds = array<i64: 1>, scalar_prefetch = 0 : i64, scratch_operands = 0 : i64, tpu.core_type = #tpu.core_type<tc>, window_params = [{transform_indices = @transform_0, window_bounds = array<i64: 8, 32>}, {pipeline_mode = #tpu.pipeline_mode<synchronous>, transform_indices = @transform_1, window_bounds = array<i64: 1, 32>}, {transform_indices = @transform_2, window_bounds = array<i64: 8, 1>}]} {
    %c0 = arith.constant 0 : index
    %c0_0 = arith.constant 0 : index
    %0 = vector.load %arg1[%c0, %c0_0] : memref<8x32xf32, #tpu.memory_space<vmem>>, vector<8x32xf32>
    %c0_1 = arith.constant 0 : index
    %c0_2 = arith.constant 0 : index
    %1 = vector.load %arg2[%c0_1, %c0_2] : memref<1x32xf32, #tpu.memory_space<vmem>>, vector<1x32xf32>
    %2 = vector.broadcast %1 : vector<1x32xf32> to vector<8x32xf32>
    %3 = arith.mulf %0, %2 : vector<8x32xf32>
    %cst = arith.constant dense<0.000000e+00> : vector<8xf32>
    %4 = vector.multi_reduction <add>, %3, %cst [1] : vector<8x32xf32> to vector<8xf32>
    %5 = vector.shape_cast %4 : vector<8xf32> to vector<8x1xf32>
    %c0_3 = arith.constant 0 : index
    %c0_4 = arith.constant 0 : index
    %6 = vector.load %arg3[%c0_3, %c0_4] : memref<8x1xf32, #tpu.memory_space<vmem>>, vector<8x1xf32>
    tpu.vector_store %arg3[%c0_3, %c0_4], %5 {strides = array<i32>} : memref<8x1xf32, #tpu.memory_space<vmem>>, vector<8x1xf32>,
    return
  }
  func.func @transform_0(%arg0: i32) -> (i32, i32) {
    %c0_i32 = arith.constant 0 : i32
    %c0_i32_0 = arith.constant 0 : i32
    return %arg0, %c0_i32 : i32, i32
  }
  func.func @transform_1(%arg0: i32) -> (i32, i32) {
    %c0_i32 = arith.constant 0 : i32
    %c0_i32_0 = arith.constant 0 : i32
    %c0_i32_1 = arith.constant 0 : i32
    return %c0_i32, %c0_i32_0 : i32, i32
  }
  func.func @transform_2(%arg0: i32) -> (i32, i32) {
    %c0_i32 = arith.constant 0 : i32
    %c0_i32_0 = arith.constant 0 : i32
    return %arg0, %c0_i32 : i32, i32
  }
}

</mosaic_0001>

<llo_original>
// kernel: tpu_custom_call.1
$region0: #{tpu_custom_call.1}
  #allocation0 [shape = 'u32[]', space=smem, size = 0x4, offset = 0x4, fixed_abs, tag = 'smem constant byte address 0x4 - core index']
  #allocation1 [shape = 'u32[144,128]{1,0:T(1,128)}', space=vmem, size = 0x12000, scoped, tag = 'internal scratch']
  %s0 = inlined_call_operand.hbm [shape: f32[8,32], index: 0, kind: input, shape index: {}]
  %s1 = inlined_call_operand.vmem [shape: f32[1,32], index: 1, kind: input, shape index: {}]
  %s2 = inlined_call_operand.vmem [shape: f32[8,1], index: 2, kind: output, shape index: {}]
  %s3 = sld [smem:[#allocation0]]
  $region22: #{tpu_custom_call.1} parent=0
    _
  %s5 = ssub.s32 1, %s3
  %s6 = scalar_select 0, %s5, %s3
  $region1: #{tpu_custom_call.1} parent=0
    #allocation2 [shape = 'u8[4096]{0}', space=vmem, size = 0x1000, scoped, tag = 'input window, operand 0, single buffered']
    #allocation3 [shape = 's32[1]{0}', space=sflag, size = 0x4, scoped, tag = 'scoped memory for tpu_custom_call.1']
    %7 = vsyncpa [#allocation3], 0
    // Predicated region
    $region2: #{tpu_custom_call.1} parent=1 // pred_check
      _
    $region3: #{tpu_custom_call.1} parent=1 // pred_check_branch
      %9 = sbr.rel (0) target = $region5
    $region4: #{tpu_custom_call.1} parent=1 // pred_region
      %s11 = ssub.s32 128, 128
      %12 = vsyncadd [#allocation3], %s11
      %s14 = sshll.u32 [#allocation2], 4
      %s15 = int_to_ptr.vmem [resolvable:$true] %s14
      %17 = dma.hbm_to_vmem [thread:$0]  %s0, 128, %s15, [#allocation3]
    $region5: #{tpu_custom_call.1} parent=1 // pred_fallthru
      _
    // Predicated region
    $region6: #{tpu_custom_call.1} parent=1 // pred_check
      _
    $region7: #{tpu_custom_call.1} parent=1 // pred_check_branch
      %19 = sbr.rel (0) target = $region9
    $region8: #{tpu_custom_call.1} parent=1 // pred_region
      _
    $region9: #{tpu_custom_call.1} parent=1 // pred_fallthru
      _
    // Predicated region
    $region10: #{tpu_custom_call.1} parent=1 // pred_check
      _
    $region11: #{tpu_custom_call.1} parent=1 // pred_check_branch
      %21 = sbr.rel (0) target = $region13
    $region12: #{tpu_custom_call.1} parent=1 // pred_region
      %22 = dma.done [#allocation3], 128
    $region13: #{tpu_custom_call.1} parent=1 // pred_fallthru
      _
    %v23 = vld [vmem:[#allocation2] sm:$0xff]
    %v24 = vld [vmem:[%s1] sm:$0x1]
    %v26 = vlaneseq
    %v27 = vshrl.u32 %v26, 7
    %v28 = vsub.s32 0, %v27
    %v29 = vrot.slane %v24, %v28
    %v31 = vmul.f32 %v23, %v29
    %vm32 = vcmask 261120
    %v33 = vsel %vm32, %v31, 0.0
    %34 = vadd.xlane.f32.xlu0 %v33
    %v35 = vpop.xlane.xlu0 %34
    %vm36 = vcmask 7168
    %37 = vst.msk [vmem:[%s2] sm:$0xff] %vm36, %v35
    // Predicated region
    $region14: #{tpu_custom_call.1} parent=1 // pred_check
      _
    $region15: #{tpu_custom_call.1} parent=1 // pred_check_branch
      %39 = sbr.rel (0) target = $region17
    $region16: #{tpu_custom_call.1} parent=1 // pred_region
      _
    $region17: #{tpu_custom_call.1} parent=1 // pred_fallthru
      _
    // Predicated region
    $region18: #{tpu_custom_call.1} parent=1 // pred_check
      _
    $region19: #{tpu_custom_call.1} parent=1 // pred_check_branch
      %41 = sbr.rel (0) target = $region21
    $region20: #{tpu_custom_call.1} parent=1 // pred_region
      _
    $region21: #{tpu_custom_call.1} parent=1 // pred_fallthru
      _
    %42 = vsyncpa [#allocation3], 1

</llo_original>
